<compile_context>
chip_gen: v7x
topology: tpu7x:2x2x1
jax: 0.10.0
libtpu: 0.0.40
codegen_flags: <defaults>
</compile_context>

<pallas_src>
import functools

import jax
import jax.numpy as jnp
from jax.experimental import pallas as pl
from jax.experimental.pallas import tpu as pltpu


def _start_row_gathers(tok_ref, tbl_hbm, row_buf, sems, *, block, slot, tb):
    """Issue `tb` concurrent (1, D) row-gather DMAs for token block `block`
    into the `slot` half of the VMEM landing buffer."""
    tok_base = block * tb
    buf_base = slot * tb
    for r in range(tb):                               # static -> fully unrolled
        t = tok_ref[tok_base + r]                     # token id (SMEM scalar)
        pltpu.make_async_copy(
            tbl_hbm.at[pl.ds(t, 1)],                  # (1, D) row of HBM table
            row_buf.at[pl.ds(buf_base + r, 1)],       # (1, D) slot in VMEM
            sems.at[buf_base + r],
        ).start()


def _wait_row_gathers(tbl_hbm, row_buf, sems, *, slot, tb):
    """Wait for the `tb` row DMAs previously issued into buffer half `slot`."""
    buf_base = slot * tb
    for r in range(tb):
        pltpu.make_async_copy(                        # src index is only a shape
            tbl_hbm.at[pl.ds(0, 1)],                  # placeholder; .wait() just
            row_buf.at[pl.ds(buf_base + r, 1)],       # blocks on the semaphore
            sems.at[buf_base + r],
        ).wait()


def _gather_scale_kernel(scaling, tok_ref, tbl_hbm, o_ref, row_buf, sems):
    tb = o_ref.shape[0]
    i = pl.program_id(0)
    nb = pl.num_programs(0)
    slot = i & 1

    # Prologue (step 0 only): nobody prefetched block 0 for us.
    @pl.when(i == 0)
    def _():
        _start_row_gathers(tok_ref, tbl_hbm, row_buf, sems,
                           block=0, slot=0, tb=tb)

    # Prefetch the NEXT block's rows BEFORE waiting on the current ones: the
    # step-(i+1) gather DMAs overlap this step's scale/store and the
    # auto-pipelined HBM writeback of this step's output block.
    @pl.when(i + 1 < nb)
    def _():
        _start_row_gathers(tok_ref, tbl_hbm, row_buf, sems,
                           block=i + 1, slot=1 - slot, tb=tb)

    _wait_row_gathers(tbl_hbm, row_buf, sems, slot=slot, tb=tb)

    off = pl.multiple_of(slot * tb, tb)               # sublane-aligned slice
    o_ref[...] = row_buf[pl.ds(off, tb), :] * scaling


def token_embeddings_forward(tokens: jnp.ndarray,
                             table: jnp.ndarray,
                             *,
                             tokens_per_block: int = 64) -> jnp.ndarray:
    """tokens: [B, S] int ids, table: [V, D]. Returns [B, S, D] = table[tokens] * sqrt(D)."""
    B, S = tokens.shape
    V, D = table.shape
    scaling = float(D) ** 0.5

    N = B * S
    if N <= tokens_per_block:
        tb = N                                        # single full-extent block
    else:
        tb = ((tokens_per_block + 7) // 8) * 8        # keep sublane (8) alignment
    n_blocks = pl.cdiv(N, tb)
    n_pad = n_blocks * tb

    flat = tokens.reshape(N).astype(jnp.int32)
    if n_pad != N:
        # Pad with token 0 (a valid row); padded outputs are sliced off below.
        flat = jnp.concatenate([flat, jnp.zeros((n_pad - N,), jnp.int32)])

    out_flat = pl.pallas_call(
        functools.partial(_gather_scale_kernel, scaling),
        out_shape=jax.ShapeDtypeStruct((n_pad, D), table.dtype),
        grid_spec=pltpu.PrefetchScalarGridSpec(
            num_scalar_prefetch=1,                         # token ids -> SMEM
            grid=(n_blocks,),
            in_specs=[
                pl.BlockSpec(memory_space=pl.ANY),         # table stays in HBM
            ],
            out_specs=pl.BlockSpec((tb, D), lambda i, tok: (i, 0)),
            scratch_shapes=[
                pltpu.VMEM((2 * tb, D), table.dtype),      # double-buffered landing
                pltpu.SemaphoreType.DMA((2 * tb,)),        # one sem per in-flight row
            ],
        ),
        compiler_params=pltpu.CompilerParams(
            # Cross-step gather prefetch carries state in VMEM scratch, so the
            # grid axis must stay sequential on a single core.
            dimension_semantics=("arbitrary",),
        ),
    )(flat, table)

    return out_flat[:N].reshape(B, S, D)


if __name__ == "__main__":
    vocab_size, hidden_size = 64, 128         # D multiple of 128 -> lane-dense stores
    batch, seq_len = 2, 8

    key = jax.random.PRNGKey(0)
    k_tbl, k_tok = jax.random.split(key)
    table = jax.random.normal(k_tbl, (vocab_size, hidden_size), dtype=jnp.float32)
    tokens = jax.random.randint(k_tok, (batch, seq_len), 0, vocab_size, dtype=jnp.int32)

    # Small tokens_per_block so the demo exercises prologue, steady-state
    # prefetch, and the final (no-prefetch) grid step.
    out = token_embeddings_forward(tokens, table, tokens_per_block=8)
    out = jax.block_until_ready(out)

    # Pure-JAX reference: nn.Embedding lookup * hidden_size**0.5
    scaling = hidden_size ** 0.5
    ref = jnp.take(table, tokens.reshape(-1), axis=0).reshape(
        batch, seq_len, hidden_size) * scaling

    assert out.shape == (batch, seq_len, hidden_size)
    assert jnp.allclose(out, ref, atol=1e-5, rtol=1e-5), "mismatch vs reference"

    print("KERNEL_OK")
</pallas_src>

<mosaic_0001>
module attributes {stable_mosaic.version = 11 : i64} {
  func.func @_gather_scale_kernel(%arg0: i32, %arg1: memref<16xi32, #tpu.memory_space<smem>>, %arg2: memref<64x128xf32, #tpu.memory_space<any>>, %arg3: memref<8x128xf32, #tpu.memory_space<vmem>>, %arg4: memref<16x128xf32, #tpu.memory_space<vmem>>, %arg5: memref<16x!tpu.dma_semaphore, #tpu.memory_space<semaphore_mem>>) attributes {dimension_semantics = [#tpu.dimension_semantics<arbitrary>], iteration_bounds = array<i64: 2>, scalar_prefetch = 1 : i64, scratch_operands = 2 : i64, tpu.core_type = #tpu.core_type<tc>, window_params = [{}, {transform_indices = @transform_1, window_bounds = array<i64: 8, 128>}]} {
    %c1_i32 = arith.constant 1 : i32
    %0 = arith.andi %arg0, %c1_i32 : i32
    %c0_i32 = arith.constant 0 : i32
    %1 = arith.cmpi eq, %arg0, %c0_i32 : i32
    %2 = arith.extui %1 : i1 to i32
    %c0_i32_0 = arith.constant 0 : i32
    %3 = arith.cmpi ne, %2, %c0_i32_0 : i32
    scf.if %3 {
      %c0_41 = arith.constant 0 : index
      %64 = memref.load %arg1[%c0_41] : memref<16xi32, #tpu.memory_space<smem>>
      %c0_i32_42 = arith.constant 0 : i32
      %c0_i32_43 = arith.constant 0 : i32
      %65 = tpu.memref_slice %arg2[%64, %c0_i32_43] : memref<64x128xf32, #tpu.memory_space<any>> -> memref<1x128xf32, #tpu.memory_space<any>>
      %c0_i32_44 = arith.constant 0 : i32
      %c0_i32_45 = arith.constant 0 : i32
      %66 = tpu.memref_slice %arg4[%c0_i32_44, %c0_i32_45] : memref<16x128xf32, #tpu.memory_space<vmem>> -> memref<1x128xf32, #tpu.memory_space<vmem>>
      %67 = tpu.memref_slice %arg5[%c0_i32_42] : memref<16x!tpu.dma_semaphore, #tpu.memory_space<semaphore_mem>> -> memref<1x!tpu.dma_semaphore, #tpu.memory_space<semaphore_mem>>
      %68 = tpu.memref_squeeze %67 : memref<1x!tpu.dma_semaphore, #tpu.memory_space<semaphore_mem>> -> memref<!tpu.dma_semaphore, #tpu.memory_space<semaphore_mem>>
      tpu.enqueue_dma source(%65 : memref<1x128xf32, #tpu.memory_space<any>>) target(%66 : memref<1x128xf32, #tpu.memory_space<vmem>>) target_semaphore(%68 : memref<!tpu.dma_semaphore, #tpu.memory_space<semaphore_mem>>)
      %c1 = arith.constant 1 : index
      %69 = memref.load %arg1[%c1] : memref<16xi32, #tpu.memory_space<smem>>
      %c1_i32_46 = arith.constant 1 : i32
      %c0_i32_47 = arith.constant 0 : i32
      %70 = tpu.memref_slice %arg2[%69, %c0_i32_47] : memref<64x128xf32, #tpu.memory_space<any>> -> memref<1x128xf32, #tpu.memory_space<any>>
      %c1_i32_48 = arith.constant 1 : i32
      %c0_i32_49 = arith.constant 0 : i32
      %71 = tpu.memref_slice %arg4[%c1_i32_48, %c0_i32_49] : memref<16x128xf32, #tpu.memory_space<vmem>> -> memref<1x128xf32, #tpu.memory_space<vmem>>
      %72 = tpu.memref_slice %arg5[%c1_i32_46] : memref<16x!tpu.dma_semaphore, #tpu.memory_space<semaphore_mem>> -> memref<1x!tpu.dma_semaphore, #tpu.memory_space<semaphore_mem>>
      %73 = tpu.memref_squeeze %72 : memref<1x!tpu.dma_semaphore, #tpu.memory_space<semaphore_mem>> -> memref<!tpu.dma_semaphore, #tpu.memory_space<semaphore_mem>>
      tpu.enqueue_dma source(%70 : memref<1x128xf32, #tpu.memory_space<any>>) target(%71 : memref<1x128xf32, #tpu.memory_space<vmem>>) target_semaphore(%73 : memref<!tpu.dma_semaphore, #tpu.memory_space<semaphore_mem>>)
      %c2 = arith.constant 2 : index
      %74 = memref.load %arg1[%c2] : memref<16xi32, #tpu.memory_space<smem>>
      %c2_i32_50 = arith.constant 2 : i32
      %c0_i32_51 = arith.constant 0 : i32
      %75 = tpu.memref_slice %arg2[%74, %c0_i32_51] : memref<64x128xf32, #tpu.memory_space<any>> -> memref<1x128xf32, #tpu.memory_space<any>>
      %c2_i32_52 = arith.constant 2 : i32
      %c0_i32_53 = arith.constant 0 : i32
      %76 = tpu.memref_slice %arg4[%c2_i32_52, %c0_i32_53] : memref<16x128xf32, #tpu.memory_space<vmem>> -> memref<1x128xf32, #tpu.memory_space<vmem>>
      %77 = tpu.memref_slice %arg5[%c2_i32_50] : memref<16x!tpu.dma_semaphore, #tpu.memory_space<semaphore_mem>> -> memref<1x!tpu.dma_semaphore, #tpu.memory_space<semaphore_mem>>
      %78 = tpu.memref_squeeze %77 : memref<1x!tpu.dma_semaphore, #tpu.memory_space<semaphore_mem>> -> memref<!tpu.dma_semaphore, #tpu.memory_space<semaphore_mem>>
      tpu.enqueue_dma source(%75 : memref<1x128xf32, #tpu.memory_space<any>>) target(%76 : memref<1x128xf32, #tpu.memory_space<vmem>>) target_semaphore(%78 : memref<!tpu.dma_semaphore, #tpu.memory_space<semaphore_mem>>)
      %c3 = arith.constant 3 : index
      %79 = memref.load %arg1[%c3] : memref<16xi32, #tpu.memory_space<smem>>
      %c3_i32_54 = arith.constant 3 : i32
      %c0_i32_55 = arith.constant 0 : i32
      %80 = tpu.memref_slice %arg2[%79, %c0_i32_55] : memref<64x128xf32, #tpu.memory_space<any>> -> memref<1x128xf32, #tpu.memory_space<any>>
      %c3_i32_56 = arith.constant 3 : i32
      %c0_i32_57 = arith.constant 0 : i32
      %81 = tpu.memref_slice %arg4[%c3_i32_56, %c0_i32_57] : memref<16x128xf32, #tpu.memory_space<vmem>> -> memref<1x128xf32, #tpu.memory_space<vmem>>
      %82 = tpu.memref_slice %arg5[%c3_i32_54] : memref<16x!tpu.dma_semaphore, #tpu.memory_space<semaphore_mem>> -> memref<1x!tpu.dma_semaphore, #tpu.memory_space<semaphore_mem>>
      %83 = tpu.memref_squeeze %82 : memref<1x!tpu.dma_semaphore, #tpu.memory_space<semaphore_mem>> -> memref<!tpu.dma_semaphore, #tpu.memory_space<semaphore_mem>>
      tpu.enqueue_dma source(%80 : memref<1x128xf32, #tpu.memory_space<any>>) target(%81 : memref<1x128xf32, #tpu.memory_space<vmem>>) target_semaphore(%83 : memref<!tpu.dma_semaphore, #tpu.memory_space<semaphore_mem>>)
      %c4 = arith.constant 4 : index
      %84 = memref.load %arg1[%c4] : memref<16xi32, #tpu.memory_space<smem>>
      %c4_i32_58 = arith.constant 4 : i32
      %c0_i32_59 = arith.constant 0 : i32
      %85 = tpu.memref_slice %arg2[%84, %c0_i32_59] : memref<64x128xf32, #tpu.memory_space<any>> -> memref<1x128xf32, #tpu.memory_space<any>>
      %c4_i32_60 = arith.constant 4 : i32
      %c0_i32_61 = arith.constant 0 : i32
      %86 = tpu.memref_slice %arg4[%c4_i32_60, %c0_i32_61] : memref<16x128xf32, #tpu.memory_space<vmem>> -> memref<1x128xf32, #tpu.memory_space<vmem>>
      %87 = tpu.memref_slice %arg5[%c4_i32_58] : memref<16x!tpu.dma_semaphore, #tpu.memory_space<semaphore_mem>> -> memref<1x!tpu.dma_semaphore, #tpu.memory_space<semaphore_mem>>
      %88 = tpu.memref_squeeze %87 : memref<1x!tpu.dma_semaphore, #tpu.memory_space<semaphore_mem>> -> memref<!tpu.dma_semaphore, #tpu.memory_space<semaphore_mem>>
      tpu.enqueue_dma source(%85 : memref<1x128xf32, #tpu.memory_space<any>>) target(%86 : memref<1x128xf32, #tpu.memory_space<vmem>>) target_semaphore(%88 : memref<!tpu.dma_semaphore, #tpu.memory_space<semaphore_mem>>)
      %c5 = arith.constant 5 : index
      %89 = memref.load %arg1[%c5] : memref<16xi32, #tpu.memory_space<smem>>
      %c5_i32_62 = arith.constant 5 : i32
      %c0_i32_63 = arith.constant 0 : i32
      %90 = tpu.memref_slice %arg2[%89, %c0_i32_63] : memref<64x128xf32, #tpu.memory_space<any>> -> memref<1x128xf32, #tpu.memory_space<any>>
      %c5_i32_64 = arith.constant 5 : i32
      %c0_i32_65 = arith.constant 0 : i32
      %91 = tpu.memref_slice %arg4[%c5_i32_64, %c0_i32_65] : memref<16x128xf32, #tpu.memory_space<vmem>> -> memref<1x128xf32, #tpu.memory_space<vmem>>
      %92 = tpu.memref_slice %arg5[%c5_i32_62] : memref<16x!tpu.dma_semaphore, #tpu.memory_space<semaphore_mem>> -> memref<1x!tpu.dma_semaphore, #tpu.memory_space<semaphore_mem>>
      %93 = tpu.memref_squeeze %92 : memref<1x!tpu.dma_semaphore, #tpu.memory_space<semaphore_mem>> -> memref<!tpu.dma_semaphore, #tpu.memory_space<semaphore_mem>>
      tpu.enqueue_dma source(%90 : memref<1x128xf32, #tpu.memory_space<any>>) target(%91 : memref<1x128xf32, #tpu.memory_space<vmem>>) target_semaphore(%93 : memref<!tpu.dma_semaphore, #tpu.memory_space<semaphore_mem>>)
      %c6 = arith.constant 6 : index
      %94 = memref.load %arg1[%c6] : memref<16xi32, #tpu.memory_space<smem>>
      %c6_i32_66 = arith.constant 6 : i32
      %c0_i32_67 = arith.constant 0 : i32
      %95 = tpu.memref_slice %arg2[%94, %c0_i32_67] : memref<64x128xf32, #tpu.memory_space<any>> -> memref<1x128xf32, #tpu.memory_space<any>>
      %c6_i32_68 = arith.constant 6 : i32
      %c0_i32_69 = arith.constant 0 : i32
      %96 = tpu.memref_slice %arg4[%c6_i32_68, %c0_i32_69] : memref<16x128xf32, #tpu.memory_space<vmem>> -> memref<1x128xf32, #tpu.memory_space<vmem>>
      %97 = tpu.memref_slice %arg5[%c6_i32_66] : memref<16x!tpu.dma_semaphore, #tpu.memory_space<semaphore_mem>> -> memref<1x!tpu.dma_semaphore, #tpu.memory_space<semaphore_mem>>
      %98 = tpu.memref_squeeze %97 : memref<1x!tpu.dma_semaphore, #tpu.memory_space<semaphore_mem>> -> memref<!tpu.dma_semaphore, #tpu.memory_space<semaphore_mem>>
      tpu.enqueue_dma source(%95 : memref<1x128xf32, #tpu.memory_space<any>>) target(%96 : memref<1x128xf32, #tpu.memory_space<vmem>>) target_semaphore(%98 : memref<!tpu.dma_semaphore, #tpu.memory_space<semaphore_mem>>)
      %c7 = arith.constant 7 : index
      %99 = memref.load %arg1[%c7] : memref<16xi32, #tpu.memory_space<smem>>
      %c7_i32_70 = arith.constant 7 : i32
      %c0_i32_71 = arith.constant 0 : i32
      %100 = tpu.memref_slice %arg2[%99, %c0_i32_71] : memref<64x128xf32, #tpu.memory_space<any>> -> memref<1x128xf32, #tpu.memory_space<any>>
      %c7_i32_72 = arith.constant 7 : i32
      %c0_i32_73 = arith.constant 0 : i32
      %101 = tpu.memref_slice %arg4[%c7_i32_72, %c0_i32_73] : memref<16x128xf32, #tpu.memory_space<vmem>> -> memref<1x128xf32, #tpu.memory_space<vmem>>
      %102 = tpu.memref_slice %arg5[%c7_i32_70] : memref<16x!tpu.dma_semaphore, #tpu.memory_space<semaphore_mem>> -> memref<1x!tpu.dma_semaphore, #tpu.memory_space<semaphore_mem>>
      %103 = tpu.memref_squeeze %102 : memref<1x!tpu.dma_semaphore, #tpu.memory_space<semaphore_mem>> -> memref<!tpu.dma_semaphore, #tpu.memory_space<semaphore_mem>>
      tpu.enqueue_dma source(%100 : memref<1x128xf32, #tpu.memory_space<any>>) target(%101 : memref<1x128xf32, #tpu.memory_space<vmem>>) target_semaphore(%103 : memref<!tpu.dma_semaphore, #tpu.memory_space<semaphore_mem>>)
    } else {
    }
    %c1_i32_1 = arith.constant 1 : i32
    %4 = arith.addi %arg0, %c1_i32_1 : i32
    %c2_i32 = arith.constant 2 : i32
    %5 = arith.cmpi slt, %4, %c2_i32 : i32
    %6 = arith.extui %5 : i1 to i32
    %c0_i32_2 = arith.constant 0 : i32
    %7 = arith.cmpi ne, %6, %c0_i32_2 : i32
    scf.if %7 {
      %c1_i32_41 = arith.constant 1 : i32
      %64 = arith.addi %arg0, %c1_i32_41 : i32
      %c1_i32_42 = arith.constant 1 : i32
      %65 = arith.subi %c1_i32_42, %0 : i32
      %c8_i32_43 = arith.constant 8 : i32
      %66 = arith.muli %64, %c8_i32_43 : i32
      %c8_i32_44 = arith.constant 8 : i32
      %67 = arith.muli %65, %c8_i32_44 : i32
      %c0_i32_45 = arith.constant 0 : i32
      %68 = arith.addi %66, %c0_i32_45 : i32
      %69 = arith.index_cast %68 : i32 to index
      %70 = memref.load %arg1[%69] : memref<16xi32, #tpu.memory_space<smem>>
      %c0_i32_46 = arith.constant 0 : i32
      %71 = arith.addi %67, %c0_i32_46 : i32
      %c0_i32_47 = arith.constant 0 : i32
      %72 = arith.addi %67, %c0_i32_47 : i32
      %c0_i32_48 = arith.constant 0 : i32
      %73 = tpu.memref_slice %arg2[%70, %c0_i32_48] : memref<64x128xf32, #tpu.memory_space<any>> -> memref<1x128xf32, #tpu.memory_space<any>>
      %c0_i32_49 = arith.constant 0 : i32
      %74 = tpu.memref_slice %arg4[%71, %c0_i32_49] : memref<16x128xf32, #tpu.memory_space<vmem>> -> memref<1x128xf32, #tpu.memory_space<vmem>>
      %75 = tpu.memref_slice %arg5[%72] : memref<16x!tpu.dma_semaphore, #tpu.memory_space<semaphore_mem>> -> memref<1x!tpu.dma_semaphore, #tpu.memory_space<semaphore_mem>>
      %76 = tpu.memref_squeeze %75 : memref<1x!tpu.dma_semaphore, #tpu.memory_space<semaphore_mem>> -> memref<!tpu.dma_semaphore, #tpu.memory_space<semaphore_mem>>
      tpu.enqueue_dma source(%73 : memref<1x128xf32, #tpu.memory_space<any>>) target(%74 : memref<1x128xf32, #tpu.memory_space<vmem>>) target_semaphore(%76 : memref<!tpu.dma_semaphore, #tpu.memory_space<semaphore_mem>>)
      %c1_i32_50 = arith.constant 1 : i32
      %77 = arith.addi %66, %c1_i32_50 : i32
      %78 = arith.index_cast %77 : i32 to index
      %79 = memref.load %arg1[%78] : memref<16xi32, #tpu.memory_space<smem>>
      %c1_i32_51 = arith.constant 1 : i32
      %80 = arith.addi %67, %c1_i32_51 : i32
      %c1_i32_52 = arith.constant 1 : i32
      %81 = arith.addi %67, %c1_i32_52 : i32
      %c0_i32_53 = arith.constant 0 : i32
      %82 = tpu.memref_slice %arg2[%79, %c0_i32_53] : memref<64x128xf32, #tpu.memory_space<any>> -> memref<1x128xf32, #tpu.memory_space<any>>
      %c0_i32_54 = arith.constant 0 : i32
      %83 = tpu.memref_slice %arg4[%80, %c0_i32_54] : memref<16x128xf32, #tpu.memory_space<vmem>> -> memref<1x128xf32, #tpu.memory_space<vmem>>
      %84 = tpu.memref_slice %arg5[%81] : memref<16x!tpu.dma_semaphore, #tpu.memory_space<semaphore_mem>> -> memref<1x!tpu.dma_semaphore, #tpu.memory_space<semaphore_mem>>
      %85 = tpu.memref_squeeze %84 : memref<1x!tpu.dma_semaphore, #tpu.memory_space<semaphore_mem>> -> memref<!tpu.dma_semaphore, #tpu.memory_space<semaphore_mem>>
      tpu.enqueue_dma source(%82 : memref<1x128xf32, #tpu.memory_space<any>>) target(%83 : memref<1x128xf32, #tpu.memory_space<vmem>>) target_semaphore(%85 : memref<!tpu.dma_semaphore, #tpu.memory_space<semaphore_mem>>)
      %c2_i32_55 = arith.constant 2 : i32
      %86 = arith.addi %66, %c2_i32_55 : i32
      %87 = arith.index_cast %86 : i32 to index
      %88 = memref.load %arg1[%87] : memref<16xi32, #tpu.memory_space<smem>>
      %c2_i32_56 = arith.constant 2 : i32
      %89 = arith.addi %67, %c2_i32_56 : i32
      %c2_i32_57 = arith.constant 2 : i32
      %90 = arith.addi %67, %c2_i32_57 : i32
      %c0_i32_58 = arith.constant 0 : i32
      %91 = tpu.memref_slice %arg2[%88, %c0_i32_58] : memref<64x128xf32, #tpu.memory_space<any>> -> memref<1x128xf32, #tpu.memory_space<any>>
      %c0_i32_59 = arith.constant 0 : i32
      %92 = tpu.memref_slice %arg4[%89, %c0_i32_59] : memref<16x128xf32, #tpu.memory_space<vmem>> -> memref<1x128xf32, #tpu.memory_space<vmem>>
      %93 = tpu.memref_slice %arg5[%90] : memref<16x!tpu.dma_semaphore, #tpu.memory_space<semaphore_mem>> -> memref<1x!tpu.dma_semaphore, #tpu.memory_space<semaphore_mem>>
      %94 = tpu.memref_squeeze %93 : memref<1x!tpu.dma_semaphore, #tpu.memory_space<semaphore_mem>> -> memref<!tpu.dma_semaphore, #tpu.memory_space<semaphore_mem>>
      tpu.enqueue_dma source(%91 : memref<1x128xf32, #tpu.memory_space<any>>) target(%92 : memref<1x128xf32, #tpu.memory_space<vmem>>) target_semaphore(%94 : memref<!tpu.dma_semaphore, #tpu.memory_space<semaphore_mem>>)
      %c3_i32_60 = arith.constant 3 : i32
      %95 = arith.addi %66, %c3_i32_60 : i32
      %96 = arith.index_cast %95 : i32 to index
      %97 = memref.load %arg1[%96] : memref<16xi32, #tpu.memory_space<smem>>
      %c3_i32_61 = arith.constant 3 : i32
      %98 = arith.addi %67, %c3_i32_61 : i32
      %c3_i32_62 = arith.constant 3 : i32
      %99 = arith.addi %67, %c3_i32_62 : i32
      %c0_i32_63 = arith.constant 0 : i32
      %100 = tpu.memref_slice %arg2[%97, %c0_i32_63] : memref<64x128xf32, #tpu.memory_space<any>> -> memref<1x128xf32, #tpu.memory_space<any>>
      %c0_i32_64 = arith.constant 0 : i32
      %101 = tpu.memref_slice %arg4[%98, %c0_i32_64] : memref<16x128xf32, #tpu.memory_space<vmem>> -> memref<1x128xf32, #tpu.memory_space<vmem>>
      %102 = tpu.memref_slice %arg5[%99] : memref<16x!tpu.dma_semaphore, #tpu.memory_space<semaphore_mem>> -> memref<1x!tpu.dma_semaphore, #tpu.memory_space<semaphore_mem>>
      %103 = tpu.memref_squeeze %102 : memref<1x!tpu.dma_semaphore, #tpu.memory_space<semaphore_mem>> -> memref<!tpu.dma_semaphore, #tpu.memory_space<semaphore_mem>>
      tpu.enqueue_dma source(%100 : memref<1x128xf32, #tpu.memory_space<any>>) target(%101 : memref<1x128xf32, #tpu.memory_space<vmem>>) target_semaphore(%103 : memref<!tpu.dma_semaphore, #tpu.memory_space<semaphore_mem>>)
      %c4_i32_65 = arith.constant 4 : i32
      %104 = arith.addi %66, %c4_i32_65 : i32
      %105 = arith.index_cast %104 : i32 to index
      %106 = memref.load %arg1[%105] : memref<16xi32, #tpu.memory_space<smem>>
      %c4_i32_66 = arith.constant 4 : i32
      %107 = arith.addi %67, %c4_i32_66 : i32
      %c4_i32_67 = arith.constant 4 : i32
      %108 = arith.addi %67, %c4_i32_67 : i32
      %c0_i32_68 = arith.constant 0 : i32
      %109 = tpu.memref_slice %arg2[%106, %c0_i32_68] : memref<64x128xf32, #tpu.memory_space<any>> -> memref<1x128xf32, #tpu.memory_space<any>>
      %c0_i32_69 = arith.constant 0 : i32
      %110 = tpu.memref_slice %arg4[%107, %c0_i32_69] : memref<16x128xf32, #tpu.memory_space<vmem>> -> memref<1x128xf32, #tpu.memory_space<vmem>>
      %111 = tpu.memref_slice %arg5[%108] : memref<16x!tpu.dma_semaphore, #tpu.memory_space<semaphore_mem>> -> memref<1x!tpu.dma_semaphore, #tpu.memory_space<semaphore_mem>>
      %112 = tpu.memref_squeeze %111 : memref<1x!tpu.dma_semaphore, #tpu.memory_space<semaphore_mem>> -> memref<!tpu.dma_semaphore, #tpu.memory_space<semaphore_mem>>
      tpu.enqueue_dma source(%109 : memref<1x128xf32, #tpu.memory_space<any>>) target(%110 : memref<1x128xf32, #tpu.memory_space<vmem>>) target_semaphore(%112 : memref<!tpu.dma_semaphore, #tpu.memory_space<semaphore_mem>>)
      %c5_i32_70 = arith.constant 5 : i32
      %113 = arith.addi %66, %c5_i32_70 : i32
      %114 = arith.index_cast %113 : i32 to index
      %115 = memref.load %arg1[%114] : memref<16xi32, #tpu.memory_space<smem>>
      %c5_i32_71 = arith.constant 5 : i32
      %116 = arith.addi %67, %c5_i32_71 : i32
      %c5_i32_72 = arith.constant 5 : i32
      %117 = arith.addi %67, %c5_i32_72 : i32
      %c0_i32_73 = arith.constant 0 : i32
      %118 = tpu.memref_slice %arg2[%115, %c0_i32_73] : memref<64x128xf32, #tpu.memory_space<any>> -> memref<1x128xf32, #tpu.memory_space<any>>
      %c0_i32_74 = arith.constant 0 : i32
      %119 = tpu.memref_slice %arg4[%116, %c0_i32_74] : memref<16x128xf32, #tpu.memory_space<vmem>> -> memref<1x128xf32, #tpu.memory_space<vmem>>
      %120 = tpu.memref_slice %arg5[%117] : memref<16x!tpu.dma_semaphore, #tpu.memory_space<semaphore_mem>> -> memref<1x!tpu.dma_semaphore, #tpu.memory_space<semaphore_mem>>
      %121 = tpu.memref_squeeze %120 : memref<1x!tpu.dma_semaphore, #tpu.memory_space<semaphore_mem>> -> memref<!tpu.dma_semaphore, #tpu.memory_space<semaphore_mem>>
      tpu.enqueue_dma source(%118 : memref<1x128xf32, #tpu.memory_space<any>>) target(%119 : memref<1x128xf32, #tpu.memory_space<vmem>>) target_semaphore(%121 : memref<!tpu.dma_semaphore, #tpu.memory_space<semaphore_mem>>)
      %c6_i32_75 = arith.constant 6 : i32
      %122 = arith.addi %66, %c6_i32_75 : i32
      %123 = arith.index_cast %122 : i32 to index
      %124 = memref.load %arg1[%123] : memref<16xi32, #tpu.memory_space<smem>>
      %c6_i32_76 = arith.constant 6 : i32
      %125 = arith.addi %67, %c6_i32_76 : i32
      %c6_i32_77 = arith.constant 6 : i32
      %126 = arith.addi %67, %c6_i32_77 : i32
      %c0_i32_78 = arith.constant 0 : i32
      %127 = tpu.memref_slice %arg2[%124, %c0_i32_78] : memref<64x128xf32, #tpu.memory_space<any>> -> memref<1x128xf32, #tpu.memory_space<any>>
      %c0_i32_79 = arith.constant 0 : i32
      %128 = tpu.memref_slice %arg4[%125, %c0_i32_79] : memref<16x128xf32, #tpu.memory_space<vmem>> -> memref<1x128xf32, #tpu.memory_space<vmem>>
      %129 = tpu.memref_slice %arg5[%126] : memref<16x!tpu.dma_semaphore, #tpu.memory_space<semaphore_mem>> -> memref<1x!tpu.dma_semaphore, #tpu.memory_space<semaphore_mem>>
      %130 = tpu.memref_squeeze %129 : memref<1x!tpu.dma_semaphore, #tpu.memory_space<semaphore_mem>> -> memref<!tpu.dma_semaphore, #tpu.memory_space<semaphore_mem>>
      tpu.enqueue_dma source(%127 : memref<1x128xf32, #tpu.memory_space<any>>) target(%128 : memref<1x128xf32, #tpu.memory_space<vmem>>) target_semaphore(%130 : memref<!tpu.dma_semaphore, #tpu.memory_space<semaphore_mem>>)
      %c7_i32_80 = arith.constant 7 : i32
      %131 = arith.addi %66, %c7_i32_80 : i32
      %132 = arith.index_cast %131 : i32 to index
      %133 = memref.load %arg1[%132] : memref<16xi32, #tpu.memory_space<smem>>
      %c7_i32_81 = arith.constant 7 : i32
      %134 = arith.addi %67, %c7_i32_81 : i32
      %c7_i32_82 = arith.constant 7 : i32
      %135 = arith.addi %67, %c7_i32_82 : i32
      %c0_i32_83 = arith.constant 0 : i32
      %136 = tpu.memref_slice %arg2[%133, %c0_i32_83] : memref<64x128xf32, #tpu.memory_space<any>> -> memref<1x128xf32, #tpu.memory_space<any>>
      %c0_i32_84 = arith.constant 0 : i32
      %137 = tpu.memref_slice %arg4[%134, %c0_i32_84] : memref<16x128xf32, #tpu.memory_space<vmem>> -> memref<1x128xf32, #tpu.memory_space<vmem>>
      %138 = tpu.memref_slice %arg5[%135] : memref<16x!tpu.dma_semaphore, #tpu.memory_space<semaphore_mem>> -> memref<1x!tpu.dma_semaphore, #tpu.memory_space<semaphore_mem>>
      %139 = tpu.memref_squeeze %138 : memref<1x!tpu.dma_semaphore, #tpu.memory_space<semaphore_mem>> -> memref<!tpu.dma_semaphore, #tpu.memory_space<semaphore_mem>>
      tpu.enqueue_dma source(%136 : memref<1x128xf32, #tpu.memory_space<any>>) target(%137 : memref<1x128xf32, #tpu.memory_space<vmem>>) target_semaphore(%139 : memref<!tpu.dma_semaphore, #tpu.memory_space<semaphore_mem>>)
    } else {
    }
    %c8_i32 = arith.constant 8 : i32
    %8 = arith.muli %0, %c8_i32 : i32
    %c0_i32_3 = arith.constant 0 : i32
    %9 = arith.addi %8, %c0_i32_3 : i32
    %c0_i32_4 = arith.constant 0 : i32
    %10 = arith.addi %8, %c0_i32_4 : i32
    %c0_i32_5 = arith.constant 0 : i32
    %c0_i32_6 = arith.constant 0 : i32
    %11 = tpu.memref_slice %arg2[%c0_i32_5, %c0_i32_6] : memref<64x128xf32, #tpu.memory_space<any>> -> memref<1x128xf32, #tpu.memory_space<any>>
    %c0_i32_7 = arith.constant 0 : i32
    %12 = tpu.memref_slice %arg4[%9, %c0_i32_7] : memref<16x128xf32, #tpu.memory_space<vmem>> -> memref<1x128xf32, #tpu.memory_space<vmem>>
    %13 = tpu.memref_slice %arg5[%10] : memref<16x!tpu.dma_semaphore, #tpu.memory_space<semaphore_mem>> -> memref<1x!tpu.dma_semaphore, #tpu.memory_space<semaphore_mem>>
    %14 = tpu.memref_squeeze %13 : memref<1x!tpu.dma_semaphore, #tpu.memory_space<semaphore_mem>> -> memref<!tpu.dma_semaphore, #tpu.memory_space<semaphore_mem>>
    tpu.wait_dma2 semaphore(%14 : memref<!tpu.dma_semaphore, #tpu.memory_space<semaphore_mem>>) src(%11 : memref<1x128xf32, #tpu.memory_space<any>>) dst(%12 : memref<1x128xf32, #tpu.memory_space<vmem>>)
    %c1_i32_8 = arith.constant 1 : i32
    %15 = arith.addi %8, %c1_i32_8 : i32
    %c1_i32_9 = arith.constant 1 : i32
    %16 = arith.addi %8, %c1_i32_9 : i32
    %c0_i32_10 = arith.constant 0 : i32
    %c0_i32_11 = arith.constant 0 : i32
    %17 = tpu.memref_slice %arg2[%c0_i32_10, %c0_i32_11] : memref<64x128xf32, #tpu.memory_space<any>> -> memref<1x128xf32, #tpu.memory_space<any>>
    %c0_i32_12 = arith.constant 0 : i32
    %18 = tpu.memref_slice %arg4[%15, %c0_i32_12] : memref<16x128xf32, #tpu.memory_space<vmem>> -> memref<1x128xf32, #tpu.memory_space<vmem>>
    %19 = tpu.memref_slice %arg5[%16] : memref<16x!tpu.dma_semaphore, #tpu.memory_space<semaphore_mem>> -> memref<1x!tpu.dma_semaphore, #tpu.memory_space<semaphore_mem>>
    %20 = tpu.memref_squeeze %19 : memref<1x!tpu.dma_semaphore, #tpu.memory_space<semaphore_mem>> -> memref<!tpu.dma_semaphore, #tpu.memory_space<semaphore_mem>>
    tpu.wait_dma2 semaphore(%20 : memref<!tpu.dma_semaphore, #tpu.memory_space<semaphore_mem>>) src(%17 : memref<1x128xf32, #tpu.memory_space<any>>) dst(%18 : memref<1x128xf32, #tpu.memory_space<vmem>>)
    %c2_i32_13 = arith.constant 2 : i32
    %21 = arith.addi %8, %c2_i32_13 : i32
    %c2_i32_14 = arith.constant 2 : i32
    %22 = arith.addi %8, %c2_i32_14 : i32
    %c0_i32_15 = arith.constant 0 : i32
    %c0_i32_16 = arith.constant 0 : i32
    %23 = tpu.memref_slice %arg2[%c0_i32_15, %c0_i32_16] : memref<64x128xf32, #tpu.memory_space<any>> -> memref<1x128xf32, #tpu.memory_space<any>>
    %c0_i32_17 = arith.constant 0 : i32
    %24 = tpu.memref_slice %arg4[%21, %c0_i32_17] : memref<16x128xf32, #tpu.memory_space<vmem>> -> memref<1x128xf32, #tpu.memory_space<vmem>>
    %25 = tpu.memref_slice %arg5[%22] : memref<16x!tpu.dma_semaphore, #tpu.memory_space<semaphore_mem>> -> memref<1x!tpu.dma_semaphore, #tpu.memory_space<semaphore_mem>>
    %26 = tpu.memref_squeeze %25 : memref<1x!tpu.dma_semaphore, #tpu.memory_space<semaphore_mem>> -> memref<!tpu.dma_semaphore, #tpu.memory_space<semaphore_mem>>
    tpu.wait_dma2 semaphore(%26 : memref<!tpu.dma_semaphore, #tpu.memory_space<semaphore_mem>>) src(%23 : memref<1x128xf32, #tpu.memory_space<any>>) dst(%24 : memref<1x128xf32, #tpu.memory_space<vmem>>)
    %c3_i32 = arith.constant 3 : i32
    %27 = arith.addi %8, %c3_i32 : i32
    %c3_i32_18 = arith.constant 3 : i32
    %28 = arith.addi %8, %c3_i32_18 : i32
    %c0_i32_19 = arith.constant 0 : i32
    %c0_i32_20 = arith.constant 0 : i32
    %29 = tpu.memref_slice %arg2[%c0_i32_19, %c0_i32_20] : memref<64x128xf32, #tpu.memory_space<any>> -> memref<1x128xf32, #tpu.memory_space<any>>
    %c0_i32_21 = arith.constant 0 : i32
    %30 = tpu.memref_slice %arg4[%27, %c0_i32_21] : memref<16x128xf32, #tpu.memory_space<vmem>> -> memref<1x128xf32, #tpu.memory_space<vmem>>
    %31 = tpu.memref_slice %arg5[%28] : memref<16x!tpu.dma_semaphore, #tpu.memory_space<semaphore_mem>> -> memref<1x!tpu.dma_semaphore, #tpu.memory_space<semaphore_mem>>
    %32 = tpu.memref_squeeze %31 : memref<1x!tpu.dma_semaphore, #tpu.memory_space<semaphore_mem>> -> memref<!tpu.dma_semaphore, #tpu.memory_space<semaphore_mem>>
    tpu.wait_dma2 semaphore(%32 : memref<!tpu.dma_semaphore, #tpu.memory_space<semaphore_mem>>) src(%29 : memref<1x128xf32, #tpu.memory_space<any>>) dst(%30 : memref<1x128xf32, #tpu.memory_space<vmem>>)
    %c4_i32 = arith.constant 4 : i32
    %33 = arith.addi %8, %c4_i32 : i32
    %c4_i32_22 = arith.constant 4 : i32
    %34 = arith.addi %8, %c4_i32_22 : i32
    %c0_i32_23 = arith.constant 0 : i32
    %c0_i32_24 = arith.constant 0 : i32
    %35 = tpu.memref_slice %arg2[%c0_i32_23, %c0_i32_24] : memref<64x128xf32, #tpu.memory_space<any>> -> memref<1x128xf32, #tpu.memory_space<any>>
    %c0_i32_25 = arith.constant 0 : i32
    %36 = tpu.memref_slice %arg4[%33, %c0_i32_25] : memref<16x128xf32, #tpu.memory_space<vmem>> -> memref<1x128xf32, #tpu.memory_space<vmem>>
    %37 = tpu.memref_slice %arg5[%34] : memref<16x!tpu.dma_semaphore, #tpu.memory_space<semaphore_mem>> -> memref<1x!tpu.dma_semaphore, #tpu.memory_space<semaphore_mem>>
    %38 = tpu.memref_squeeze %37 : memref<1x!tpu.dma_semaphore, #tpu.memory_space<semaphore_mem>> -> memref<!tpu.dma_semaphore, #tpu.memory_space<semaphore_mem>>
    tpu.wait_dma2 semaphore(%38 : memref<!tpu.dma_semaphore, #tpu.memory_space<semaphore_mem>>) src(%35 : memref<1x128xf32, #tpu.memory_space<any>>) dst(%36 : memref<1x128xf32, #tpu.memory_space<vmem>>)
    %c5_i32 = arith.constant 5 : i32
    %39 = arith.addi %8, %c5_i32 : i32
    %c5_i32_26 = arith.constant 5 : i32
    %40 = arith.addi %8, %c5_i32_26 : i32
    %c0_i32_27 = arith.constant 0 : i32
    %c0_i32_28 = arith.constant 0 : i32
    %41 = tpu.memref_slice %arg2[%c0_i32_27, %c0_i32_28] : memref<64x128xf32, #tpu.memory_space<any>> -> memref<1x128xf32, #tpu.memory_space<any>>
    %c0_i32_29 = arith.constant 0 : i32
    %42 = tpu.memref_slice %arg4[%39, %c0_i32_29] : memref<16x128xf32, #tpu.memory_space<vmem>> -> memref<1x128xf32, #tpu.memory_space<vmem>>
    %43 = tpu.memref_slice %arg5[%40] : memref<16x!tpu.dma_semaphore, #tpu.memory_space<semaphore_mem>> -> memref<1x!tpu.dma_semaphore, #tpu.memory_space<semaphore_mem>>
    %44 = tpu.memref_squeeze %43 : memref<1x!tpu.dma_semaphore, #tpu.memory_space<semaphore_mem>> -> memref<!tpu.dma_semaphore, #tpu.memory_space<semaphore_mem>>
    tpu.wait_dma2 semaphore(%44 : memref<!tpu.dma_semaphore, #tpu.memory_space<semaphore_mem>>) src(%41 : memref<1x128xf32, #tpu.memory_space<any>>) dst(%42 : memref<1x128xf32, #tpu.memory_space<vmem>>)
    %c6_i32 = arith.constant 6 : i32
    %45 = arith.addi %8, %c6_i32 : i32
    %c6_i32_30 = arith.constant 6 : i32
    %46 = arith.addi %8, %c6_i32_30 : i32
    %c0_i32_31 = arith.constant 0 : i32
    %c0_i32_32 = arith.constant 0 : i32
    %47 = tpu.memref_slice %arg2[%c0_i32_31, %c0_i32_32] : memref<64x128xf32, #tpu.memory_space<any>> -> memref<1x128xf32, #tpu.memory_space<any>>
    %c0_i32_33 = arith.constant 0 : i32
    %48 = tpu.memref_slice %arg4[%45, %c0_i32_33] : memref<16x128xf32, #tpu.memory_space<vmem>> -> memref<1x128xf32, #tpu.memory_space<vmem>>
    %49 = tpu.memref_slice %arg5[%46] : memref<16x!tpu.dma_semaphore, #tpu.memory_space<semaphore_mem>> -> memref<1x!tpu.dma_semaphore, #tpu.memory_space<semaphore_mem>>
    %50 = tpu.memref_squeeze %49 : memref<1x!tpu.dma_semaphore, #tpu.memory_space<semaphore_mem>> -> memref<!tpu.dma_semaphore, #tpu.memory_space<semaphore_mem>>
    tpu.wait_dma2 semaphore(%50 : memref<!tpu.dma_semaphore, #tpu.memory_space<semaphore_mem>>) src(%47 : memref<1x128xf32, #tpu.memory_space<any>>) dst(%48 : memref<1x128xf32, #tpu.memory_space<vmem>>)
    %c7_i32 = arith.constant 7 : i32
    %51 = arith.addi %8, %c7_i32 : i32
    %c7_i32_34 = arith.constant 7 : i32
    %52 = arith.addi %8, %c7_i32_34 : i32
    %c0_i32_35 = arith.constant 0 : i32
    %c0_i32_36 = arith.constant 0 : i32
    %53 = tpu.memref_slice %arg2[%c0_i32_35, %c0_i32_36] : memref<64x128xf32, #tpu.memory_space<any>> -> memref<1x128xf32, #tpu.memory_space<any>>
    %c0_i32_37 = arith.constant 0 : i32
    %54 = tpu.memref_slice %arg4[%51, %c0_i32_37] : memref<16x128xf32, #tpu.memory_space<vmem>> -> memref<1x128xf32, #tpu.memory_space<vmem>>
    %55 = tpu.memref_slice %arg5[%52] : memref<16x!tpu.dma_semaphore, #tpu.memory_space<semaphore_mem>> -> memref<1x!tpu.dma_semaphore, #tpu.memory_space<semaphore_mem>>
    %56 = tpu.memref_squeeze %55 : memref<1x!tpu.dma_semaphore, #tpu.memory_space<semaphore_mem>> -> memref<!tpu.dma_semaphore, #tpu.memory_space<semaphore_mem>>
    tpu.wait_dma2 semaphore(%56 : memref<!tpu.dma_semaphore, #tpu.memory_space<semaphore_mem>>) src(%53 : memref<1x128xf32, #tpu.memory_space<any>>) dst(%54 : memref<1x128xf32, #tpu.memory_space<vmem>>)
    %c8_i32_38 = arith.constant 8 : i32
    %57 = arith.muli %0, %c8_i32_38 : i32
    %58 = tpu.assume_multiple %57, 8 : i32
    %59 = arith.index_cast %58 : i32 to index
    %c0 = arith.constant 0 : index
    %60 = vector.load %arg4[%59, %c0] : memref<16x128xf32, #tpu.memory_space<vmem>>, vector<8x128xf32>
    %cst = arith.constant 11.3137083 : f32
    %61 = vector.broadcast %cst : f32 to vector<8x128xf32>
    %62 = arith.mulf %60, %61 : vector<8x128xf32>
    %c0_39 = arith.constant 0 : index
    %c0_40 = arith.constant 0 : index
    %63 = vector.load %arg3[%c0_39, %c0_40] : memref<8x128xf32, #tpu.memory_space<vmem>>, vector<8x128xf32>
    tpu.vector_store %arg3[%c0_39, %c0_40], %62 {strides = array<i32>} : memref<8x128xf32, #tpu.memory_space<vmem>>, vector<8x128xf32>,
    return
  }
  func.func @transform_1(%arg0: i32, %arg1: memref<16xi32, #tpu.memory_space<smem>>) -> (i32, i32) {
    %c0_i32 = arith.constant 0 : i32
    %c0_i32_0 = arith.constant 0 : i32
    return %arg0, %c0_i32 : i32, i32
  }
}

</mosaic_0001>

<llo_original>
// kernel: tpu_custom_call.1
$region0: #{tpu_custom_call.1}
  #allocation0 [shape = 'u32[]', space=smem, size = 0x4, offset = 0x4, fixed_abs, tag = 'smem constant byte address 0x4 - core index']
  #allocation1 [shape = 'u32[144,128]{1,0:T(1,128)}', space=vmem, size = 0x12000, scoped, tag = 'internal scratch']
  #allocation2 [shape = 'f32[16,128]{1,0:T(8,128)}', space=vmem, size = 0x2000, scoped, tag = 'scratch operand']
  #allocation3 [shape = 's32[16]{0}', space=sflag, size = 0x40, scoped, tag = 'scratch operand']
  #allocation4 [shape = 's32[1]{0}', space=sflag, size = 0x4, scoped, tag = 'scoped memory for tpu_custom_call.1']
  #allocation5 [shape = 'u8[512]{0}', space=smem, size = 0x200, scoped, tag = 'prefetched SMEM operand 0']
  #allocation8 [shape = 's32[]', space=sflag, size = 0x4, offset = 0, fixed_abs, tag = 'sflag constant byte address 0x0 - dummy sync flag']
  #allocation9 [shape = 's32[]', space=sflag, size = 0x4, offset = 0, fixed_abs, tag = 'sflag constant byte address 0x0 - dummy sync flag']
  #allocation10 [shape = 'u32[]', space=smem, size = 0x4, offset = 0x44, fixed_abs, tag = 'smem constant byte address 0x44 - assertion arg 0']
  #allocation11 [shape = 'u32[]', space=smem, size = 0x4, offset = 0x48, fixed_abs, tag = 'smem constant byte address 0x48 - assertion arg 1']
  #allocation12 [shape = 's32[]', space=sflag, size = 0x4, offset = 0, fixed_abs, tag = 'sflag constant byte address 0x0 - dummy sync flag']
  #allocation13 [shape = 's32[]', space=sflag, size = 0x4, offset = 0, fixed_abs, tag = 'sflag constant byte address 0x0 - dummy sync flag']
  #allocation14 [shape = 's32[]', space=sflag, size = 0x4, offset = 0, fixed_abs, tag = 'sflag constant byte address 0x0 - dummy sync flag']
  #allocation15 [shape = 's32[]', space=sflag, size = 0x4, offset = 0, fixed_abs, tag = 'sflag constant byte address 0x0 - dummy sync flag']
  #allocation16 [shape = 's32[]', space=sflag, size = 0x4, offset = 0, fixed_abs, tag = 'sflag constant byte address 0x0 - dummy sync flag']
  #allocation17 [shape = 's32[]', space=sflag, size = 0x4, offset = 0, fixed_abs, tag = 'sflag constant byte address 0x0 - dummy sync flag']
  #allocation18 [shape = 's32[]', space=sflag, size = 0x4, offset = 0, fixed_abs, tag = 'sflag constant byte address 0x0 - dummy sync flag']
  #allocation19 [shape = 's32[]', space=sflag, size = 0x4, offset = 0, fixed_abs, tag = 'sflag constant byte address 0x0 - dummy sync flag']
  #allocation20 [shape = 's32[]', space=sflag, size = 0x4, offset = 0, fixed_abs, tag = 'sflag constant byte address 0x0 - dummy sync flag']
  #allocation21 [shape = 's32[]', space=sflag, size = 0x4, offset = 0, fixed_abs, tag = 'sflag constant byte address 0x0 - dummy sync flag']
  #allocation22 [shape = 's32[]', space=sflag, size = 0x4, offset = 0, fixed_abs, tag = 'sflag constant byte address 0x0 - dummy sync flag']
  #allocation23 [shape = 's32[]', space=sflag, size = 0x4, offset = 0, fixed_abs, tag = 'sflag constant byte address 0x0 - dummy sync flag']
  #allocation24 [shape = 's32[]', space=sflag, size = 0x4, offset = 0, fixed_abs, tag = 'sflag constant byte address 0x0 - dummy sync flag']
  #allocation25 [shape = 's32[]', space=sflag, size = 0x4, offset = 0, fixed_abs, tag = 'sflag constant byte address 0x0 - dummy sync flag']
  #allocation26 [shape = 's32[]', space=sflag, size = 0x4, offset = 0, fixed_abs, tag = 'sflag constant byte address 0x0 - dummy sync flag']
  #allocation27 [shape = 's32[]', space=sflag, size = 0x4, offset = 0, fixed_abs, tag = 'sflag constant byte address 0x0 - dummy sync flag']
  #allocation28 [shape = 's32[]', space=sflag, size = 0x4, offset = 0, fixed_abs, tag = 'sflag constant byte address 0x0 - dummy sync flag']
  #allocation29 [shape = 's32[]', space=sflag, size = 0x4, offset = 0, fixed_abs, tag = 'sflag constant byte address 0x0 - dummy sync flag']
  #allocation30 [shape = 's32[]', space=sflag, size = 0x4, offset = 0, fixed_abs, tag = 'sflag constant byte address 0x0 - dummy sync flag']
  #allocation31 [shape = 's32[]', space=sflag, size = 0x4, offset = 0, fixed_abs, tag = 'sflag constant byte address 0x0 - dummy sync flag']
  #allocation32 [shape = 's32[]', space=sflag, size = 0x4, offset = 0, fixed_abs, tag = 'sflag constant byte address 0x0 - dummy sync flag']
  #allocation33 [shape = 's32[]', space=sflag, size = 0x4, offset = 0, fixed_abs, tag = 'sflag constant byte address 0x0 - dummy sync flag']
  #allocation34 [shape = 's32[]', space=sflag, size = 0x4, offset = 0, fixed_abs, tag = 'sflag constant byte address 0x0 - dummy sync flag']
  #allocation35 [shape = 's32[]', space=sflag, size = 0x4, offset = 0, fixed_abs, tag = 'sflag constant byte address 0x0 - dummy sync flag']
  #allocation36 [shape = 's32[]', space=sflag, size = 0x4, offset = 0, fixed_abs, tag = 'sflag constant byte address 0x0 - dummy sync flag']
  #allocation37 [shape = 's32[]', space=sflag, size = 0x4, offset = 0, fixed_abs, tag = 'sflag constant byte address 0x0 - dummy sync flag']
  #allocation38 [shape = 's32[]', space=sflag, size = 0x4, offset = 0, fixed_abs, tag = 'sflag constant byte address 0x0 - dummy sync flag']
  #allocation39 [shape = 's32[]', space=sflag, size = 0x4, offset = 0, fixed_abs, tag = 'sflag constant byte address 0x0 - dummy sync flag']
  #allocation40 [shape = 's32[]', space=sflag, size = 0x4, offset = 0, fixed_abs, tag = 'sflag constant byte address 0x0 - dummy sync flag']
  #allocation41 [shape = 's32[]', space=sflag, size = 0x4, offset = 0, fixed_abs, tag = 'sflag constant byte address 0x0 - dummy sync flag']
  %s0 = inlined_call_operand.hbm [shape: s32[16], index: 0, kind: input, shape index: {}]
  %s1 = inlined_call_operand.hbm [shape: f32[64,128], index: 1, kind: input, shape index: {}]
  %s2 = inlined_call_operand.hbm [shape: f32[16,128], index: 2, kind: output, shape index: {}]
  %s3 = sld [smem:[#allocation0]]
  $region97: #{tpu_custom_call.1} parent=0
    _
  %s5 = ssub.s32 1, %s3
  %s6 = scalar_select 0, %s5, %s3
  %8 = dma.hbm_to_smem %s0, 16, [#allocation5], [#allocation4]
  %9 = dma.done [#allocation4], 16
  %10 = sfence
  $region1: #{tpu_custom_call.1} parent=0
    #allocation6 [shape = 'u8[8192]{0}', space=vmem, size = 0x2000, scoped, tag = 'output window, operand 0']
    #allocation7 [shape = 's32[2]{0}', space=sflag, size = 0x8, scoped, tag = 'scoped memory for tpu_custom_call.1']
    %11 = vsyncpa [#allocation7], 0
    %s12 = scalar_lea.sflag [#allocation7], 1
    %13 = vsyncpa %s12, 0
    loop: start=0, step=1, limit=3
    $region2: #{tpu_custom_call.1} parent=1 // loop_pre_header
      _
    $region3: #{tpu_custom_call.1} parent=1 // loop_header
      %s15 = sphi 0, %s19
      %p16 = scmp.ge.s32.totalorder %s15, 3
      %s24 = sphi 0, %s26
      %s27 = sphi 0, %s24
      %s37 = sphi 0, %s27
    $region4: #{tpu_custom_call.1} parent=1 // loop_header_branch
      %18 = sbr.rel (%p16) target = $region8
    $region5: #{tpu_custom_call.1} parent=1 // loop_body
      %s20 = ssub.s32 %s15, 1
      %s21 = sadd.s32 %s15, 1
      %s22 = ssub.s32 %s15, %s21
      %p23 = scmp.eq.s32.totalorder %s22, 0
      %s25 = sadd.s32 %s24, 1
      %s26 = scalar_select %p23, %s24, %s25
      %p28 = pneg %p23
      %p29 = scmp.eq.s32.totalorder %s15, 1
      %p30 = por %p28, %p29
      %p31 = scmp.ne.s32.totalorder %s24, %s27
      %p32 = scmp.eq.s32.totalorder %s15, 0
      %p33 = por %p31, %p32
      %p34 = scmp.ne.s32.totalorder %s24, %s27
      %p35 = scmp.eq.s32.totalorder %s20, 1
      %p36 = por %p34, %p35
      %p38 = scmp.ne.s32.totalorder %s27, %s37
      %p39 = scmp.eq.s32.totalorder %s20, 0
      %p40 = por %p38, %p39
      %p41 = scmp.lt.s32.totalorder %s15, 2
      // Predicated region
      $region9: #{tpu_custom_call.1} parent=5 // pred_check
        %p42 = pneg %p41
      $region10: #{tpu_custom_call.1} parent=5 // pred_check_branch
        %44 = sbr.rel (%p42) target = $region12
      $region11: #{tpu_custom_call.1} parent=5 // pred_region
        %p45 = pneg %p33
        %p46 = pneg %p30
        %s47 = sand.u32 %s24, 1
        %s48 = scalar_lea.sflag [#allocation7], %s47
        %s49 = sand.u32 %s24, 1
        %s50 = smul.addr %s49, 8
        %s51 = scalar_lea.vmem [#allocation6], %s50
        %s52 = sand.u32 %s15, 1
        %p53 = scmp.eq.s32.totalorder %s15, 0
        // Predicated region
        $region13: #{tpu_custom_call.1} parent=11 // pred_check
          %p54 = pneg %p53
        $region14: #{tpu_custom_call.1} parent=11 // pred_check_branch
          %56 = sbr.rel (%p54) target = $region16
        $region15: #{tpu_custom_call.1} parent=11 // pred_region
          %s57 = sld [smem:[#allocation5]]
          %s58 = smul.addr %s57, 16
          %s59 = scalar_lea.hbm %s1, %s58
          // Predicated region
          $region17: #{tpu_custom_call.1} parent=15 // pred_check
            _
          $region18: #{tpu_custom_call.1} parent=15 // pred_check_branch
            %61 = sbr.rel target = $region20
          $region19: #{tpu_custom_call.1} parent=15 // pred_region
            %62 = sst [smem:[#allocation10]] [#allocation9]
            %63 = sst [smem:[#allocation11]] [#allocation8]
          $region20: #{tpu_custom_call.1} parent=15 // pred_fallthru
            _
          %65 = shalt.err (0)
          %s67 = sshll.u32 [#allocation2], 4
          %s68 = int_to_ptr.vmem [resolvable:$true] %s67
          %70 = dma.hbm_to_vmem [thread:$0]  %s59, 16, %s68, [#allocation3]
          %s71 = sld [smem:[#allocation5 + $0x1]]
          %s72 = smul.addr %s71, 16
          %s73 = scalar_lea.hbm %s1, %s72
          %s74 = scalar_lea.vmem [#allocation2], 1
          %s75 = scalar_lea.sflag [#allocation3], 1
          // Predicated region
          $region21: #{tpu_custom_call.1} parent=15 // pred_check
            _
          $region22: #{tpu_custom_call.1} parent=15 // pred_check_branch
            %77 = sbr.rel target = $region24
          $region23: #{tpu_custom_call.1} parent=15 // pred_region
            %78 = sst [smem:[#allocation10]] [#allocation13]
            %79 = sst [smem:[#allocation11]] [#allocation12]
          $region24: #{tpu_custom_call.1} parent=15 // pred_fallthru
            _
          %81 = shalt.err (0)
          %s83 = sshll.u32 %s74, 4
          %s84 = int_to_ptr.vmem [resolvable:$true] %s83
          %86 = dma.hbm_to_vmem [thread:$0]  %s73, 16, %s84, %s75
          %s87 = sld [smem:[#allocation5 + $0x2]]
          %s88 = smul.addr %s87, 16
          %s89 = scalar_lea.hbm %s1, %s88
          %s90 = scalar_lea.vmem [#allocation2], 2
          %s91 = scalar_lea.sflag [#allocation3], 2
          // Predicated region
          $region25: #{tpu_custom_call.1} parent=15 // pred_check
            _
          $region26: #{tpu_custom_call.1} parent=15 // pred_check_branch
            %93 = sbr.rel target = $region28
          $region27: #{tpu_custom_call.1} parent=15 // pred_region
            %94 = sst [smem:[#allocation10]] [#allocation15]
            %95 = sst [smem:[#allocation11]] [#allocation14]
          $region28: #{tpu_custom_call.1} parent=15 // pred_fallthru
            _
          %97 = shalt.err (0)
          %s99 = sshll.u32 %s90, 4
          %s100 = int_to_ptr.vmem [resolvable:$true] %s99
          %102 = dma.hbm_to_vmem [thread:$0]  %s89, 16, %s100, %s91
          %s103 = sld [smem:[#allocation5 + $0x3]]
          %s104 = smul.addr %s103, 16
          %s105 = scalar_lea.hbm %s1, %s104
          %s106 = scalar_lea.vmem [#allocation2], 3
          %s107 = scalar_lea.sflag [#allocation3], 3
          // Predicated region
          $region29: #{tpu_custom_call.1} parent=15 // pred_check
            _
          $region30: #{tpu_custom_call.1} parent=15 // pred_check_branch
            %109 = sbr.rel target = $region32
          $region31: #{tpu_custom_call.1} parent=15 // pred_region
            %110 = sst [smem:[#allocation10]] [#allocation17]
            %111 = sst [smem:[#allocation11]] [#allocation16]
          $region32: #{tpu_custom_call.1} parent=15 // pred_fallthru
            _
          %113 = shalt.err (0)
          %s115 = sshll.u32 %s106, 4
          %s116 = int_to_ptr.vmem [resolvable:$true] %s115
          %118 = dma.hbm_to_vmem [thread:$0]  %s105, 16, %s116, %s107
          %s119 = sld [smem:[#allocation5 + $0x4]]
          %s120 = smul.addr %s119, 16
          %s121 = scalar_lea.hbm %s1, %s120
          %s122 = scalar_lea.vmem [#allocation2], 4
          %s123 = scalar_lea.sflag [#allocation3], 4
          // Predicated region
          $region33: #{tpu_custom_call.1} parent=15 // pred_check
            _
          $region34: #{tpu_custom_call.1} parent=15 // pred_check_branch
            %125 = sbr.rel target = $region36
          $region35: #{tpu_custom_call.1} parent=15 // pred_region
            %126 = sst [smem:[#allocation10]] [#allocation19]
            %127 = sst [smem:[#allocation11]] [#allocation18]
          $region36: #{tpu_custom_call.1} parent=15 // pred_fallthru
            _
          %129 = shalt.err (0)
          %s131 = sshll.u32 %s122, 4
          %s132 = int_to_ptr.vmem [resolvable:$true] %s131
          %134 = dma.hbm_to_vmem [thread:$0]  %s121, 16, %s132, %s123
          %s135 = sld [smem:[#allocation5 + $0x5]]
          %s136 = smul.addr %s135, 16
          %s137 = scalar_lea.hbm %s1, %s136
          %s138 = scalar_lea.vmem [#allocation2], 5
          %s139 = scalar_lea.sflag [#allocation3], 5
          // Predicated region
          $region37: #{tpu_custom_call.1} parent=15 // pred_check
            _
          $region38: #{tpu_custom_call.1} parent=15 // pred_check_branch
            %141 = sbr.rel target = $region40
          $region39: #{tpu_custom_call.1} parent=15 // pred_region
            %142 = sst [smem:[#allocation10]] [#allocation21]
            %143 = sst [smem:[#allocation11]] [#allocation20]
          $region40: #{tpu_custom_call.1} parent=15 // pred_fallthru
            _
          %145 = shalt.err (0)
          %s147 = sshll.u32 %s138, 4
          %s148 = int_to_ptr.vmem [resolvable:$true] %s147
          %150 = dma.hbm_to_vmem [thread:$0]  %s137, 16, %s148, %s139
          %s151 = sld [smem:[#allocation5 + $0x6]]
          %s152 = smul.addr %s151, 16
          %s153 = scalar_lea.hbm %s1, %s152
          %s154 = scalar_lea.vmem [#allocation2], 6
          %s155 = scalar_lea.sflag [#allocation3], 6
          // Predicated region
          $region41: #{tpu_custom_call.1} parent=15 // pred_check
            _
          $region42: #{tpu_custom_call.1} parent=15 // pred_check_branch
            %157 = sbr.rel target = $region44
          $region43: #{tpu_custom_call.1} parent=15 // pred_region
            %158 = sst [smem:[#allocation10]] [#allocation23]
            %159 = sst [smem:[#allocation11]] [#allocation22]
          $region44: #{tpu_custom_call.1} parent=15 // pred_fallthru
            _
          %161 = shalt.err (0)
          %s163 = sshll.u32 %s154, 4
          %s164 = int_to_ptr.vmem [resolvable:$true] %s163
          %166 = dma.hbm_to_vmem [thread:$0]  %s153, 16, %s164, %s155
          %s167 = sld [smem:[#allocation5 + $0x7]]
          %s168 = smul.addr %s167, 16
          %s169 = scalar_lea.hbm %s1, %s168
          %s170 = scalar_lea.vmem [#allocation2], 7
          %s171 = scalar_lea.sflag [#allocation3], 7
          // Predicated region
          $region45: #{tpu_custom_call.1} parent=15 // pred_check
            _
          $region46: #{tpu_custom_call.1} parent=15 // pred_check_branch
            %173 = sbr.rel target = $region48
          $region47: #{tpu_custom_call.1} parent=15 // pred_region
            %174 = sst [smem:[#allocation10]] [#allocation25]
            %175 = sst [smem:[#allocation11]] [#allocation24]
          $region48: #{tpu_custom_call.1} parent=15 // pred_fallthru
            _
          %177 = shalt.err (0)
          %s179 = sshll.u32 %s170, 4
          %s180 = int_to_ptr.vmem [resolvable:$true] %s179
          %182 = dma.hbm_to_vmem [thread:$0]  %s169, 16, %s180, %s171
        $region16: #{tpu_custom_call.1} parent=11 // pred_fallthru
          _
        %s183 = sadd.s32 %s15, 1
        %p184 = scmp.lt.s32.totalorder %s183, 2
        // Predicated region
        $region49: #{tpu_custom_call.1} parent=11 // pred_check
          %p185 = pneg %p184
        $region50: #{tpu_custom_call.1} parent=11 // pred_check_branch
          %187 = sbr.rel (%p185) target = $region52
        $region51: #{tpu_custom_call.1} parent=11 // pred_region
          %s188 = ssub.s32 1, %s52
          %s189 = smul.u32 %s183, 8
          %s190 = smul.u32 %s188, 8
          %s191 = sld [smem:[#allocation5 + %s189]]
          %s192 = smul.addr %s191, 16
          %s193 = scalar_lea.hbm %s1, %s192
          %s194 = scalar_lea.vmem [#allocation2], %s190
          %s195 = scalar_lea.sflag [#allocation3], %s190
          // Predicated region
          $region53: #{tpu_custom_call.1} parent=51 // pred_check
            _
          $region54: #{tpu_custom_call.1} parent=51 // pred_check_branch
            %197 = sbr.rel target = $region56
          $region55: #{tpu_custom_call.1} parent=51 // pred_region
            %198 = sst [smem:[#allocation10]] [#allocation27]
            %199 = sst [smem:[#allocation11]] [#allocation26]
          $region56: #{tpu_custom_call.1} parent=51 // pred_fallthru
            _
          %201 = shalt.err (0)
          %s203 = sshll.u32 %s194, 4
          %s204 = int_to_ptr.vmem [resolvable:$true] %s203
          %206 = dma.hbm_to_vmem [thread:$0]  %s193, 16, %s204, %s195
          %s207 = sadd.s32 %s189, 1
          %s208 = sld [smem:[#allocation5 + %s207]]
          %s209 = sadd.s32 %s190, 1
          %s210 = smul.addr %s208, 16
          %s211 = scalar_lea.hbm %s1, %s210
          %s212 = scalar_lea.vmem [#allocation2], %s209
          %s213 = scalar_lea.sflag [#allocation3], %s209
          // Predicated region
          $region57: #{tpu_custom_call.1} parent=51 // pred_check
            _
          $region58: #{tpu_custom_call.1} parent=51 // pred_check_branch
            %215 = sbr.rel target = $region60
          $region59: #{tpu_custom_call.1} parent=51 // pred_region
            %216 = sst [smem:[#allocation10]] [#allocation29]
            %217 = sst [smem:[#allocation11]] [#allocation28]
          $region60: #{tpu_custom_call.1} parent=51 // pred_fallthru
            _
          %219 = shalt.err (0)
          %s221 = sshll.u32 %s212, 4
          %s222 = int_to_ptr.vmem [resolvable:$true] %s221
          %224 = dma.hbm_to_vmem [thread:$0]  %s211, 16, %s222, %s213
          %s225 = sadd.s32 %s189, 2
          %s226 = sld [smem:[#allocation5 + %s225]]
          %s227 = sadd.s32 %s190, 2
          %s228 = smul.addr %s226, 16
          %s229 = scalar_lea.hbm %s1, %s228
          %s230 = scalar_lea.vmem [#allocation2], %s227
          %s231 = scalar_lea.sflag [#allocation3], %s227
          // Predicated region
          $region61: #{tpu_custom_call.1} parent=51 // pred_check
            _
          $region62: #{tpu_custom_call.1} parent=51 // pred_check_branch
            %233 = sbr.rel target = $region64
          $region63: #{tpu_custom_call.1} parent=51 // pred_region
            %234 = sst [smem:[#allocation10]] [#allocation31]
            %235 = sst [smem:[#allocation11]] [#allocation30]
          $region64: #{tpu_custom_call.1} parent=51 // pred_fallthru
            _
          %237 = shalt.err (0)
          %s239 = sshll.u32 %s230, 4
          %s240 = int_to_ptr.vmem [resolvable:$true] %s239
          %242 = dma.hbm_to_vmem [thread:$0]  %s229, 16, %s240, %s231
          %s243 = sadd.s32 %s189, 3
          %s244 = sld [smem:[#allocation5 + %s243]]
          %s245 = sadd.s32 %s190, 3
          %s246 = smul.addr %s244, 16
          %s247 = scalar_lea.hbm %s1, %s246
          %s248 = scalar_lea.vmem [#allocation2], %s245
          %s249 = scalar_lea.sflag [#allocation3], %s245
          // Predicated region
          $region65: #{tpu_custom_call.1} parent=51 // pred_check
            _
          $region66: #{tpu_custom_call.1} parent=51 // pred_check_branch
            %251 = sbr.rel target = $region68
          $region67: #{tpu_custom_call.1} parent=51 // pred_region
            %252 = sst [smem:[#allocation10]] [#allocation33]
            %253 = sst [smem:[#allocation11]] [#allocation32]
          $region68: #{tpu_custom_call.1} parent=51 // pred_fallthru
            _
          %255 = shalt.err (0)
          %s257 = sshll.u32 %s248, 4
          %s258 = int_to_ptr.vmem [resolvable:$true] %s257
          %260 = dma.hbm_to_vmem [thread:$0]  %s247, 16, %s258, %s249
          %s261 = sadd.s32 %s189, 4
          %s262 = sld [smem:[#allocation5 + %s261]]
          %s263 = sadd.s32 %s190, 4
          %s264 = smul.addr %s262, 16
          %s265 = scalar_lea.hbm %s1, %s264
          %s266 = scalar_lea.vmem [#allocation2], %s263
          %s267 = scalar_lea.sflag [#allocation3], %s263
          // Predicated region
          $region69: #{tpu_custom_call.1} parent=51 // pred_check
            _
          $region70: #{tpu_custom_call.1} parent=51 // pred_check_branch
            %269 = sbr.rel target = $region72
          $region71: #{tpu_custom_call.1} parent=51 // pred_region
            %270 = sst [smem:[#allocation10]] [#allocation35]
            %271 = sst [smem:[#allocation11]] [#allocation34]
          $region72: #{tpu_custom_call.1} parent=51 // pred_fallthru
            _
          %273 = shalt.err (0)
          %s275 = sshll.u32 %s266, 4
          %s276 = int_to_ptr.vmem [resolvable:$true] %s275
          %278 = dma.hbm_to_vmem [thread:$0]  %s265, 16, %s276, %s267
          %s279 = sadd.s32 %s189, 5
          %s280 = sld [smem:[#allocation5 + %s279]]
          %s281 = sadd.s32 %s190, 5
          %s282 = smul.addr %s280, 16
          %s283 = scalar_lea.hbm %s1, %s282
          %s284 = scalar_lea.vmem [#allocation2], %s281
          %s285 = scalar_lea.sflag [#allocation3], %s281
          // Predicated region
          $region73: #{tpu_custom_call.1} parent=51 // pred_check
            _
          $region74: #{tpu_custom_call.1} parent=51 // pred_check_branch
            %287 = sbr.rel target = $region76
          $region75: #{tpu_custom_call.1} parent=51 // pred_region
            %288 = sst [smem:[#allocation10]] [#allocation37]
            %289 = sst [smem:[#allocation11]] [#allocation36]
          $region76: #{tpu_custom_call.1} parent=51 // pred_fallthru
            _
          %291 = shalt.err (0)
          %s293 = sshll.u32 %s284, 4
          %s294 = int_to_ptr.vmem [resolvable:$true] %s293
          %296 = dma.hbm_to_vmem [thread:$0]  %s283, 16, %s294, %s285
          %s297 = sadd.s32 %s189, 6
          %s298 = sld [smem:[#allocation5 + %s297]]
          %s299 = sadd.s32 %s190, 6
          %s300 = smul.addr %s298, 16
          %s301 = scalar_lea.hbm %s1, %s300
          %s302 = scalar_lea.vmem [#allocation2], %s299
          %s303 = scalar_lea.sflag [#allocation3], %s299
          // Predicated region
          $region77: #{tpu_custom_call.1} parent=51 // pred_check
            _
          $region78: #{tpu_custom_call.1} parent=51 // pred_check_branch
            %305 = sbr.rel target = $region80
          $region79: #{tpu_custom_call.1} parent=51 // pred_region
            %306 = sst [smem:[#allocation10]] [#allocation39]
            %307 = sst [smem:[#allocation11]] [#allocation38]
          $region80: #{tpu_custom_call.1} parent=51 // pred_fallthru
            _
          %309 = shalt.err (0)
          %s311 = sshll.u32 %s302, 4
          %s312 = int_to_ptr.vmem [resolvable:$true] %s311
          %314 = dma.hbm_to_vmem [thread:$0]  %s301, 16, %s312, %s303
          %s315 = sadd.s32 %s189, 7
          %s316 = sld [smem:[#allocation5 + %s315]]
          %s317 = sadd.s32 %s190, 7
          %s318 = smul.addr %s316, 16
          %s319 = scalar_lea.hbm %s1, %s318
          %s320 = scalar_lea.vmem [#allocation2], %s317
          %s321 = scalar_lea.sflag [#allocation3], %s317
          // Predicated region
          $region81: #{tpu_custom_call.1} parent=51 // pred_check
            _
          $region82: #{tpu_custom_call.1} parent=51 // pred_check_branch
            %323 = sbr.rel target = $region84
          $region83: #{tpu_custom_call.1} parent=51 // pred_region
            %324 = sst [smem:[#allocation10]] [#allocation41]
            %325 = sst [smem:[#allocation11]] [#allocation40]
          $region84: #{tpu_custom_call.1} parent=51 // pred_fallthru
            _
          %327 = shalt.err (0)
          %s329 = sshll.u32 %s320, 4
          %s330 = int_to_ptr.vmem [resolvable:$true] %s329
          %332 = dma.hbm_to_vmem [thread:$0]  %s319, 16, %s330, %s321
        $region52: #{tpu_custom_call.1} parent=11 // pred_fallthru
          _
        %s333 = smul.u32 %s52, 8
        %s334 = scalar_lea.sflag [#allocation3], %s333
        %s335 = smul.u32 1, 1
        %s336 = sshll.u32 %s335, 4
        %337 = dma.done %s334, %s336
        %s338 = sadd.s32 %s333, 1
        %s339 = scalar_lea.sflag [#allocation3], %s338
        %s340 = sshll.u32 %s335, 4
        %341 = dma.done %s339, %s340
        %s342 = sadd.s32 %s333, 2
        %s343 = scalar_lea.sflag [#allocation3], %s342
        %s344 = sshll.u32 %s335, 4
        %345 = dma.done %s343, %s344
        %s346 = sadd.s32 %s333, 3
        %s347 = scalar_lea.sflag [#allocation3], %s346
        %s348 = sshll.u32 %s335, 4
        %349 = dma.done %s347, %s348
        %s350 = sadd.s32 %s333, 4
        %s351 = scalar_lea.sflag [#allocation3], %s350
        %s352 = sshll.u32 %s335, 4
        %353 = dma.done %s351, %s352
        %s354 = sadd.s32 %s333, 5
        %s355 = scalar_lea.sflag [#allocation3], %s354
        %s356 = sshll.u32 %s335, 4
        %357 = dma.done %s355, %s356
        %s358 = sadd.s32 %s333, 6
        %s359 = scalar_lea.sflag [#allocation3], %s358
        %s360 = sshll.u32 %s335, 4
        %361 = dma.done %s359, %s360
        %s362 = sadd.s32 %s333, 7
        %s363 = scalar_lea.sflag [#allocation3], %s362
        %s364 = sshll.u32 %s335, 4
        %365 = dma.done %s363, %s364
        %s366 = scalar_lea.vmem [#allocation2], %s333
        %v367 = vld [vmem:[%s366] sm:$0xff]
        %v368 = vmul.f32 %v367, 11.313708
        %369 = vst [vmem:[%s51] sm:$0xff] %v368
        %s370 = sand.u32 %s24, 1
        %s371 = scalar_lea.sflag [#allocation7], %s370
        %s372 = sand.u32 %s24, 1
        %s373 = smul.addr %s372, 8
        %s374 = scalar_lea.vmem [#allocation6], %s373
        // Predicated region
        $region85: #{tpu_custom_call.1} parent=11 // pred_check
          %p375 = pneg %p30
        $region86: #{tpu_custom_call.1} parent=11 // pred_check_branch
          %377 = sbr.rel (%p375) target = $region88
        $region87: #{tpu_custom_call.1} parent=11 // pred_region
          %s379 = ssub.s32 128, 128
          %380 = vsyncadd %s371, %s379
          %s381 = smul.addr %s15, 128
          %s382 = scalar_lea.hbm %s2, %s381
          %s384 = sshll.u32 %s374, 4
          %s385 = int_to_ptr.vmem [resolvable:$true] %s384
          %387 = dma.vmem_to_hbm [thread:$0]  %s385, 128, %s382, %s371
        $region88: #{tpu_custom_call.1} parent=11 // pred_fallthru
          _
      $region12: #{tpu_custom_call.1} parent=5 // pred_fallthru
        _
      %p388 = scmp.le.s32.totalorder 1, %s15
      // Predicated region
      $region89: #{tpu_custom_call.1} parent=5 // pred_check
        %p389 = pneg %p388
      $region90: #{tpu_custom_call.1} parent=5 // pred_check_branch
        %391 = sbr.rel (%p389) target = $region92
      $region91: #{tpu_custom_call.1} parent=5 // pred_region
        %s392 = ssub.s32 %s15, 1
        // Predicated region
        $region93: #{tpu_custom_call.1} parent=91 // pred_check
          %p393 = pneg %p36
        $region94: #{tpu_custom_call.1} parent=91 // pred_check_branch
          %395 = sbr.rel (%p393) target = $region96
        $region95: #{tpu_custom_call.1} parent=91 // pred_region
          %s396 = sand.u32 %s27, 1
          %s397 = scalar_lea.sflag [#allocation7], %s396
          %s398 = sand.u32 %s27, 1
          %s399 = smul.addr %s398, 8
          %s400 = scalar_lea.vmem [#allocation6], %s399
          %401 = dma.done %s397, 128
        $region96: #{tpu_custom_call.1} parent=91 // pred_fallthru
          _
      $region92: #{tpu_custom_call.1} parent=5 // pred_fallthru
        _
    $region6: #{tpu_custom_call.1} parent=1 // loop_footer
      %s19 = sadd.s32 1, %s15
    $region7: #{tpu_custom_call.1} parent=1 // loop_footer_branch
      %14 = sbr.rel target = $region3
    $region8: #{tpu_custom_call.1} parent=1 // loop_exit
      _
    %402 = vsyncpa [#allocation7], 1
    %s403 = scalar_lea.sflag [#allocation7], 1
    %404 = vsyncpa %s403, 1
  %405 = vsyncmov [#allocation3]
  %s406 = vpop.sfrf %405
  %p407 = scmp.eq.s32.totalorder %s406, 0
  %p408 = pneg %p407
  %410 = shalt.err (%p408)
  %s411 = scalar_lea.sflag [#allocation3], 1
  %412 = vsyncmov %s411
  %s413 = vpop.sfrf %412
  %p414 = scmp.eq.s32.totalorder %s413, 0
  %p415 = pneg %p414
  %417 = shalt.err (%p415)
  %s418 = scalar_lea.sflag [#allocation3], 2
  %419 = vsyncmov %s418
  %s420 = vpop.sfrf %419
  %p421 = scmp.eq.s32.totalorder %s420, 0
  %p422 = pneg %p421
  %424 = shalt.err (%p422)
  %s425 = scalar_lea.sflag [#allocation3], 3
  %426 = vsyncmov %s425
  %s427 = vpop.sfrf %426
  %p428 = scmp.eq.s32.totalorder %s427, 0
  %p429 = pneg %p428
  %431 = shalt.err (%p429)
  %s432 = scalar_lea.sflag [#allocation3], 4
  %433 = vsyncmov %s432
  %s434 = vpop.sfrf %433
  %p435 = scmp.eq.s32.totalorder %s434, 0
  %p436 = pneg %p435
  %438 = shalt.err (%p436)
  %s439 = scalar_lea.sflag [#allocation3], 5
  %440 = vsyncmov %s439
  %s441 = vpop.sfrf %440
  %p442 = scmp.eq.s32.totalorder %s441, 0
  %p443 = pneg %p442
  %445 = shalt.err (%p443)
  %s446 = scalar_lea.sflag [#allocation3], 6
  %447 = vsyncmov %s446
  %s448 = vpop.sfrf %447
  %p449 = scmp.eq.s32.totalorder %s448, 0
  %p450 = pneg %p449
  %452 = shalt.err (%p450)
  %s453 = scalar_lea.sflag [#allocation3], 7
  %454 = vsyncmov %s453
  %s455 = vpop.sfrf %454
  %p456 = scmp.eq.s32.totalorder %s455, 0
  %p457 = pneg %p456
  %459 = shalt.err (%p457)
  %s460 = scalar_lea.sflag [#allocation3], 8
  %461 = vsyncmov %s460
  %s462 = vpop.sfrf %461
  %p463 = scmp.eq.s32.totalorder %s462, 0
  %p464 = pneg %p463
  %466 = shalt.err (%p464)
  %s467 = scalar_lea.sflag [#allocation3], 9
  %468 = vsyncmov %s467
  %s469 = vpop.sfrf %468
  %p470 = scmp.eq.s32.totalorder %s469, 0
  %p471 = pneg %p470
  %473 = shalt.err (%p471)
  %s474 = scalar_lea.sflag [#allocation3], 10
  %475 = vsyncmov %s474
  %s476 = vpop.sfrf %475
  %p477 = scmp.eq.s32.totalorder %s476, 0
  %p478 = pneg %p477
  %480 = shalt.err (%p478)
  %s481 = scalar_lea.sflag [#allocation3], 11
  %482 = vsyncmov %s481
  %s483 = vpop.sfrf %482
  %p484 = scmp.eq.s32.totalorder %s483, 0
  %p485 = pneg %p484
  %487 = shalt.err (%p485)
  %s488 = scalar_lea.sflag [#allocation3], 12
  %489 = vsyncmov %s488
  %s490 = vpop.sfrf %489
  %p491 = scmp.eq.s32.totalorder %s490, 0
  %p492 = pneg %p491
  %494 = shalt.err (%p492)
  %s495 = scalar_lea.sflag [#allocation3], 13
  %496 = vsyncmov %s495
  %s497 = vpop.sfrf %496
  %p498 = scmp.eq.s32.totalorder %s497, 0
  %p499 = pneg %p498
  %501 = shalt.err (%p499)
  %s502 = scalar_lea.sflag [#allocation3], 14
  %503 = vsyncmov %s502
  %s504 = vpop.sfrf %503
  %p505 = scmp.eq.s32.totalorder %s504, 0
  %p506 = pneg %p505
  %508 = shalt.err (%p506)
  %s509 = scalar_lea.sflag [#allocation3], 15
  %510 = vsyncmov %s509
  %s511 = vpop.sfrf %510
  %p512 = scmp.eq.s32.totalorder %s511, 0
  %p513 = pneg %p512
  %515 = shalt.err (%p513)

</llo_original>
